<compile_context>
chip_gen: v6e
topology: v6e:2x2x1
jax: 0.10.0
libtpu: 0.0.40
codegen_flags: <defaults>
</compile_context>

<pallas_src>
import functools

import jax
import jax.numpy as jnp
from jax import lax
from jax.experimental import pallas as pl
from jax.experimental.pallas import tpu as pltpu

_EPS = float(jnp.finfo(jnp.float32).eps)  # == torch.finfo(torch.float32).eps
_LANE = 128
_SUBLANE = 8
_MAX_T_TILE = 16384   # (32, 16384) f32 block = 2 MiB -> 8 MiB double-buffered (v7x-safe)
_MAX_B_TILE = 32      # keeps register-carried accumulators at ~20 vregs (no spills)
_UNROLL = 8           # chunk-loop unroll factor inside lax.fori_loop


def _round_up(x, m):
    return ((x + m - 1) // m) * m


def _cdiv(a, b):
    return (a + b - 1) // b


def _si_snr_moments_kernel(p_ref, t_ref,
                           o_p, o_t, o_pp, o_tt, o_pt,
                           sp, st, spp, stt, spt,
                           *, t_real, t_tile, nk, n_chunks, ragged):
    """Grid = (batch tiles, time splits, time tiles within a split).

    Streams five raw moments over the time tiles of one (batch tile, split)
    pair. Accumulators live in lane-dense (b_tile, 128) f32 VMEM scratch across
    grid steps and are register-carried inside a step, so the hot loop is pure
    input vld + VPU work.
    """
    h = pl.program_id(1)
    k = pl.program_id(2)
    bt = sp.shape[0]

    @pl.when(k == 0)
    def _init():
        for acc in (sp, st, spp, stt, spt):
            acc[...] = jnp.zeros_like(acc)

    # Unclamped global element offset of this tile. (The index_map clamps the
    # actual DMA to the last in-bounds tile; masking below zeroes any excess,
    # so a clamped redundant tile contributes exactly nothing.)
    tile_start = (h * nk + k) * t_tile

    def accumulate(mask_tail):
        lane_base = (lax.broadcasted_iota(jnp.int32, (bt, _LANE), 1)
                     if mask_tail else None)

        def step(i, carry):
            a_p, a_t, a_pp, a_tt, a_pt = carry
            off = i * _LANE
            if not isinstance(off, int):
                off = pl.multiple_of(off, _LANE)
            pc = p_ref[:, pl.ds(off, _LANE)]
            tc = t_ref[:, pl.ds(off, _LANE)]
            if pc.dtype != jnp.float32:   # bf16 inputs accumulate in f32
                pc = pc.astype(jnp.float32)
                tc = tc.astype(jnp.float32)
            if mask_tail:
                # jnp.where (not multiply): NaN-safe against unspecified
                # edge-block data beyond the real time extent.
                valid = (tile_start + off + lane_base) < t_real
                pc = jnp.where(valid, pc, 0.0)
                tc = jnp.where(valid, tc, 0.0)
            return (a_p + pc, a_t + tc,
                    a_pp + pc * pc, a_tt + tc * tc, a_pt + pc * tc)

        def run():
            # Scratch touched once per grid step; chunk loop carries in vregs.
            carry = (sp[...], st[...], spp[...], stt[...], spt[...])
            n_major = n_chunks // _UNROLL
            if n_major > 0:
                def body(j, c):
                    for u in range(_UNROLL):
                        c = step(j * _UNROLL + u, c)
                    return c
                carry = lax.fori_loop(0, n_major, body, carry)
            for r in range(n_major * _UNROLL, n_chunks):  # static tail chunks
                carry = step(r, carry)
            a_p, a_t, a_pp, a_tt, a_pt = carry
            sp[...] = a_p
            st[...] = a_t
            spp[...] = a_pp
            stt[...] = a_tt
            spt[...] = a_pt
        return run

    if not ragged:
        accumulate(False)()
    else:
        # Only tiles that overrun the real time extent pay the masking cost.
        tile_full = tile_start + t_tile <= t_real
        pl.when(tile_full)(accumulate(False))
        pl.when(jnp.logical_not(tile_full))(accumulate(True))

    @pl.when(k == pl.num_programs(2) - 1)
    def _finalize():
        # One-off cross-lane (XLU) reductions; scalar SI-SNR math runs in XLA.
        # Rows of a partial batch tile beyond B hold garbage but their output
        # store is masked to the in-bounds rows, so they never reach HBM.
        o_p[0] = jnp.sum(sp[...], axis=-1, keepdims=True)
        o_t[0] = jnp.sum(st[...], axis=-1, keepdims=True)
        o_pp[0] = jnp.sum(spp[...], axis=-1, keepdims=True)
        o_tt[0] = jnp.sum(stt[...], axis=-1, keepdims=True)
        o_pt[0] = jnp.sum(spt[...], axis=-1, keepdims=True)


def si_snr_loss(output_audio, target_audio, *, max_time_tile=_MAX_T_TILE):
    """Pallas equivalent of SI_SNR.forward -> {'loss': scalar}."""
    assert output_audio.shape == target_audio.shape
    p, t = output_audio, target_audio
    if p.ndim == 1:
        p, t = p[None, :], t[None, :]
    elif p.ndim > 2:
        p = p.reshape(-1, p.shape[-1])
        t = t.reshape(-1, t.shape[-1])
    B, T = p.shape

    # --- tile selection (no wrapper padding: edge blocks + in-kernel masking
    # handle ragged batch/time, so inputs are read from HBM exactly once) ---
    t_tile = min(max_time_tile, _round_up(T, _LANE))
    nt_total = _cdiv(T, t_tile)

    b_tile = min(_MAX_B_TILE, _round_up(B, _SUBLANE))
    nb = _cdiv(B, b_tile)
    if nb < 2 and B > _SUBLANE:
        # Give the second v7x TensorCore its own batch tile.
        b_tile = _round_up(_cdiv(B, 2), _SUBLANE)
        nb = _cdiv(B, b_tile)

    # If the batch can't provide two parallel tiles, split time into two
    # "parallel" halves whose raw moments are summed in the XLA epilogue.
    # On single-core chips (v5e/v6e) the extra finalize is negligible.
    n_splits = 2 if (nb < 2 and nt_total >= 4) else 1
    nk = _cdiv(nt_total, n_splits)

    ragged = (T % t_tile != 0) or (n_splits * nk != nt_total)
    n_chunks = t_tile // _LANE

    kernel = functools.partial(
        _si_snr_moments_kernel,
        t_real=T, t_tile=t_tile, nk=nk, n_chunks=n_chunks, ragged=ragged)

    last_tile = nt_total - 1

    def in_map(b, h, k):
        # Clamp so no block is fully out of bounds; the kernel masks clamped
        # (redundant) tiles to zero via their unclamped offset.
        return (b, jnp.minimum(h * nk + k, last_tile))

    out_shape = tuple(
        jax.ShapeDtypeStruct((n_splits, B, 1), jnp.float32) for _ in range(5))
    out_specs = tuple(
        pl.BlockSpec((1, b_tile, 1), lambda b, h, k: (h, b, 0)) for _ in range(5))

    moments = pl.pallas_call(
        kernel,
        out_shape=out_shape,
        grid_spec=pltpu.PrefetchScalarGridSpec(
            num_scalar_prefetch=0,
            grid=(nb, n_splits, nk),
            in_specs=[pl.BlockSpec((b_tile, t_tile), in_map),
                      pl.BlockSpec((b_tile, t_tile), in_map)],
            out_specs=out_specs,
            scratch_shapes=[pltpu.VMEM((b_tile, _LANE), jnp.float32)] * 5,
        ),
        compiler_params=pltpu.CompilerParams(
            dimension_semantics=("parallel", "parallel", "arbitrary"),
            vmem_limit_bytes=32 * 1024 * 1024,
        ),
    )(p, t)

    # --- tiny XLA epilogue: combine split moments, per-sample SI-SNR, mean ---
    s_p, s_t, s_pp, s_tt, s_pt = (jnp.sum(m, axis=0)[:, 0] for m in moments)
    eps = jnp.float32(_EPS)
    inv_t = jnp.float32(1.0 / T)
    # Centered (zero-mean) second moments from raw moments.
    # NOTE: f32 cancellation only matters for huge DC offsets; validated vs ref.
    c_pt = s_pt - s_p * s_t * inv_t
    c_tt = s_tt - s_t * s_t * inv_t
    c_pp = s_pp - s_p * s_p * inv_t
    # eps placement matches torchmetrics: on centered sums and the final ratio.
    alpha = (c_pt + eps) / (c_tt + eps)
    ts_sq = jnp.maximum(alpha * alpha * c_tt, 0.0)                   # ||alpha*t_c||^2
    noise_sq = jnp.maximum(ts_sq - 2.0 * alpha * c_pt + c_pp, 0.0)   # ||alpha*t_c - p_c||^2
    si_snr = 10.0 * jnp.log10((ts_sq + eps) / (noise_sq + eps))
    return {"loss": jnp.mean(si_snr)}


def _si_snr_ref(preds, target):
    """Pure-JAX reference (two-pass, torchmetrics formula) for correctness check."""
    eps = jnp.float32(_EPS)
    p = preds - jnp.mean(preds, axis=-1, keepdims=True)
    t = target - jnp.mean(target, axis=-1, keepdims=True)
    alpha = (jnp.sum(p * t, -1, keepdims=True) + eps) / (
        jnp.sum(t * t, -1, keepdims=True) + eps
    )
    ts = alpha * t
    noise = ts - p
    val = (jnp.sum(ts * ts, -1) + eps) / (jnp.sum(noise * noise, -1) + eps)
    return jnp.mean(10.0 * jnp.log10(val))


if __name__ == "__main__":
    key = jax.random.PRNGKey(0)

    # Small shapes consistent with the module: (batch, time) audio.
    k1, k2 = jax.random.split(key)
    B, T = 4, 256
    target_audio = jax.random.normal(k1, (B, T), dtype=jnp.float32)
    output_audio = target_audio + 0.3 * jax.random.normal(k2, (B, T), dtype=jnp.float32)

    result = si_snr_loss(output_audio, target_audio)
    loss = jax.block_until_ready(result["loss"])
    ref = _si_snr_ref(output_audio, target_audio)
    assert jnp.allclose(loss, ref, atol=1e-3, rtol=1e-3), (loss, ref)

    # Unaligned batch/time: exercises edge blocks + masked ragged tail (no pad).
    k3, k4 = jax.random.split(k2)
    B2, T2 = 3, 9000
    tgt2 = jax.random.normal(k3, (B2, T2), dtype=jnp.float32)
    out2 = tgt2 + 0.5 * jax.random.normal(k4, (B2, T2), dtype=jnp.float32)
    loss2 = jax.block_until_ready(si_snr_loss(out2, tgt2)["loss"])
    ref2 = _si_snr_ref(out2, tgt2)
    assert jnp.allclose(loss2, ref2, atol=1e-3, rtol=1e-3), (loss2, ref2)

    # Force small tiles: exercises the 2-way time split (parallel halves),
    # clamped redundant tile and tail masking in one go.
    k5, k6 = jax.random.split(k4)
    B3, T3 = 5, 2300
    tgt3 = jax.random.normal(k5, (B3, T3), dtype=jnp.float32)
    out3 = tgt3 + 0.4 * jax.random.normal(k6, (B3, T3), dtype=jnp.float32)
    loss3 = jax.block_until_ready(si_snr_loss(out3, tgt3, max_time_tile=512)["loss"])
    ref3 = _si_snr_ref(out3, tgt3)
    assert jnp.allclose(loss3, ref3, atol=1e-3, rtol=1e-3), (loss3, ref3)

    print("KERNEL_OK")
</pallas_src>

<mosaic_0001>
module attributes {stable_mosaic.version = 11 : i64} {
  func.func @_si_snr_moments_kernel(%arg0: i32, %arg1: i32, %arg2: i32, %arg3: memref<8x256xf32, #tpu.memory_space<vmem>>, %arg4: memref<8x256xf32, #tpu.memory_space<vmem>>, %arg5: memref<1x8x1xf32, #tpu.memory_space<vmem>>, %arg6: memref<1x8x1xf32, #tpu.memory_space<vmem>>, %arg7: memref<1x8x1xf32, #tpu.memory_space<vmem>>, %arg8: memref<1x8x1xf32, #tpu.memory_space<vmem>>, %arg9: memref<1x8x1xf32, #tpu.memory_space<vmem>>, %arg10: memref<8x128xf32, #tpu.memory_space<vmem>>, %arg11: memref<8x128xf32, #tpu.memory_space<vmem>>, %arg12: memref<8x128xf32, #tpu.memory_space<vmem>>, %arg13: memref<8x128xf32, #tpu.memory_space<vmem>>, %arg14: memref<8x128xf32, #tpu.memory_space<vmem>>) attributes {dimension_semantics = [#tpu.dimension_semantics<parallel>, #tpu.dimension_semantics<parallel>, #tpu.dimension_semantics<arbitrary>], iteration_bounds = array<i64: 1, 1, 1>, scalar_prefetch = 0 : i64, scratch_operands = 5 : i64, tpu.core_type = #tpu.core_type<tc>, window_params = [{transform_indices = @transform_0, window_bounds = array<i64: 8, 256>}, {transform_indices = @transform_1, window_bounds = array<i64: 8, 256>}, {transform_indices = @transform_2, window_bounds = array<i64: 1, 8, 1>}, {transform_indices = @transform_3, window_bounds = array<i64: 1, 8, 1>}, {transform_indices = @transform_4, window_bounds = array<i64: 1, 8, 1>}, {transform_indices = @transform_5, window_bounds = array<i64: 1, 8, 1>}, {transform_indices = @transform_6, window_bounds = array<i64: 1, 8, 1>}]} {
    %c0_i32 = arith.constant 0 : i32
    %0 = arith.cmpi eq, %arg2, %c0_i32 : i32
    %1 = arith.extui %0 : i1 to i32
    %c0_i32_0 = arith.constant 0 : i32
    %2 = arith.cmpi ne, %1, %c0_i32_0 : i32
    scf.if %2 {
      %cst = arith.constant 0.000000e+00 : f32
      %36 = vector.broadcast %cst : f32 to vector<8x128xf32>
      %c0_29 = arith.constant 0 : index
      %c0_30 = arith.constant 0 : index
      %37 = vector.load %arg10[%c0_29, %c0_30] : memref<8x128xf32, #tpu.memory_space<vmem>>, vector<8x128xf32>
      tpu.vector_store %arg10[%c0_29, %c0_30], %36 {strides = array<i32>} : memref<8x128xf32, #tpu.memory_space<vmem>>, vector<8x128xf32>,
      %cst_31 = arith.constant 0.000000e+00 : f32
      %38 = vector.broadcast %cst_31 : f32 to vector<8x128xf32>
      %c0_32 = arith.constant 0 : index
      %c0_33 = arith.constant 0 : index
      %39 = vector.load %arg11[%c0_32, %c0_33] : memref<8x128xf32, #tpu.memory_space<vmem>>, vector<8x128xf32>
      tpu.vector_store %arg11[%c0_32, %c0_33], %38 {strides = array<i32>} : memref<8x128xf32, #tpu.memory_space<vmem>>, vector<8x128xf32>,
      %cst_34 = arith.constant 0.000000e+00 : f32
      %40 = vector.broadcast %cst_34 : f32 to vector<8x128xf32>
      %c0_35 = arith.constant 0 : index
      %c0_36 = arith.constant 0 : index
      %41 = vector.load %arg12[%c0_35, %c0_36] : memref<8x128xf32, #tpu.memory_space<vmem>>, vector<8x128xf32>
      tpu.vector_store %arg12[%c0_35, %c0_36], %40 {strides = array<i32>} : memref<8x128xf32, #tpu.memory_space<vmem>>, vector<8x128xf32>,
      %cst_37 = arith.constant 0.000000e+00 : f32
      %42 = vector.broadcast %cst_37 : f32 to vector<8x128xf32>
      %c0_38 = arith.constant 0 : index
      %c0_39 = arith.constant 0 : index
      %43 = vector.load %arg13[%c0_38, %c0_39] : memref<8x128xf32, #tpu.memory_space<vmem>>, vector<8x128xf32>
      tpu.vector_store %arg13[%c0_38, %c0_39], %42 {strides = array<i32>} : memref<8x128xf32, #tpu.memory_space<vmem>>, vector<8x128xf32>,
      %cst_40 = arith.constant 0.000000e+00 : f32
      %44 = vector.broadcast %cst_40 : f32 to vector<8x128xf32>
      %c0_41 = arith.constant 0 : index
      %c0_42 = arith.constant 0 : index
      %45 = vector.load %arg14[%c0_41, %c0_42] : memref<8x128xf32, #tpu.memory_space<vmem>>, vector<8x128xf32>
      tpu.vector_store %arg14[%c0_41, %c0_42], %44 {strides = array<i32>} : memref<8x128xf32, #tpu.memory_space<vmem>>, vector<8x128xf32>,
    } else {
    }
    %c0 = arith.constant 0 : index
    %c0_1 = arith.constant 0 : index
    %3 = vector.load %arg10[%c0, %c0_1] : memref<8x128xf32, #tpu.memory_space<vmem>>, vector<8x128xf32>
    %c0_2 = arith.constant 0 : index
    %c0_3 = arith.constant 0 : index
    %4 = vector.load %arg11[%c0_2, %c0_3] : memref<8x128xf32, #tpu.memory_space<vmem>>, vector<8x128xf32>
    %c0_4 = arith.constant 0 : index
    %c0_5 = arith.constant 0 : index
    %5 = vector.load %arg12[%c0_4, %c0_5] : memref<8x128xf32, #tpu.memory_space<vmem>>, vector<8x128xf32>
    %c0_6 = arith.constant 0 : index
    %c0_7 = arith.constant 0 : index
    %6 = vector.load %arg13[%c0_6, %c0_7] : memref<8x128xf32, #tpu.memory_space<vmem>>, vector<8x128xf32>
    %c0_8 = arith.constant 0 : index
    %c0_9 = arith.constant 0 : index
    %7 = vector.load %arg14[%c0_8, %c0_9] : memref<8x128xf32, #tpu.memory_space<vmem>>, vector<8x128xf32>
    %c0_10 = arith.constant 0 : index
    %c0_11 = arith.constant 0 : index
    %8 = vector.load %arg3[%c0_10, %c0_11] : memref<8x256xf32, #tpu.memory_space<vmem>>, vector<8x128xf32>
    %c0_12 = arith.constant 0 : index
    %c0_13 = arith.constant 0 : index
    %9 = vector.load %arg4[%c0_12, %c0_13] : memref<8x256xf32, #tpu.memory_space<vmem>>, vector<8x128xf32>
    %10 = arith.addf %3, %8 : vector<8x128xf32>
    %11 = arith.addf %4, %9 : vector<8x128xf32>
    %12 = arith.mulf %8, %8 : vector<8x128xf32>
    %13 = arith.addf %5, %12 : vector<8x128xf32>
    %14 = arith.mulf %9, %9 : vector<8x128xf32>
    %15 = arith.addf %6, %14 : vector<8x128xf32>
    %16 = arith.mulf %8, %9 : vector<8x128xf32>
    %17 = arith.addf %7, %16 : vector<8x128xf32>
    %c0_14 = arith.constant 0 : index
    %c128 = arith.constant 128 : index
    %18 = vector.load %arg3[%c0_14, %c128] : memref<8x256xf32, #tpu.memory_space<vmem>>, vector<8x128xf32>
    %c0_15 = arith.constant 0 : index
    %c128_16 = arith.constant 128 : index
    %19 = vector.load %arg4[%c0_15, %c128_16] : memref<8x256xf32, #tpu.memory_space<vmem>>, vector<8x128xf32>
    %20 = arith.addf %10, %18 : vector<8x128xf32>
    %21 = arith.addf %11, %19 : vector<8x128xf32>
    %22 = arith.mulf %18, %18 : vector<8x128xf32>
    %23 = arith.addf %13, %22 : vector<8x128xf32>
    %24 = arith.mulf %19, %19 : vector<8x128xf32>
    %25 = arith.addf %15, %24 : vector<8x128xf32>
    %26 = arith.mulf %18, %19 : vector<8x128xf32>
    %27 = arith.addf %17, %26 : vector<8x128xf32>
    %c0_17 = arith.constant 0 : index
    %c0_18 = arith.constant 0 : index
    %28 = vector.load %arg10[%c0_17, %c0_18] : memref<8x128xf32, #tpu.memory_space<vmem>>, vector<8x128xf32>
    tpu.vector_store %arg10[%c0_17, %c0_18], %20 {strides = array<i32>} : memref<8x128xf32, #tpu.memory_space<vmem>>, vector<8x128xf32>,
    %c0_19 = arith.constant 0 : index
    %c0_20 = arith.constant 0 : index
    %29 = vector.load %arg11[%c0_19, %c0_20] : memref<8x128xf32, #tpu.memory_space<vmem>>, vector<8x128xf32>
    tpu.vector_store %arg11[%c0_19, %c0_20], %21 {strides = array<i32>} : memref<8x128xf32, #tpu.memory_space<vmem>>, vector<8x128xf32>,
    %c0_21 = arith.constant 0 : index
    %c0_22 = arith.constant 0 : index
    %30 = vector.load %arg12[%c0_21, %c0_22] : memref<8x128xf32, #tpu.memory_space<vmem>>, vector<8x128xf32>
    tpu.vector_store %arg12[%c0_21, %c0_22], %23 {strides = array<i32>} : memref<8x128xf32, #tpu.memory_space<vmem>>, vector<8x128xf32>,
    %c0_23 = arith.constant 0 : index
    %c0_24 = arith.constant 0 : index
    %31 = vector.load %arg13[%c0_23, %c0_24] : memref<8x128xf32, #tpu.memory_space<vmem>>, vector<8x128xf32>
    tpu.vector_store %arg13[%c0_23, %c0_24], %25 {strides = array<i32>} : memref<8x128xf32, #tpu.memory_space<vmem>>, vector<8x128xf32>,
    %c0_25 = arith.constant 0 : index
    %c0_26 = arith.constant 0 : index
    %32 = vector.load %arg14[%c0_25, %c0_26] : memref<8x128xf32, #tpu.memory_space<vmem>>, vector<8x128xf32>
    tpu.vector_store %arg14[%c0_25, %c0_26], %27 {strides = array<i32>} : memref<8x128xf32, #tpu.memory_space<vmem>>, vector<8x128xf32>,
    %c0_i32_27 = arith.constant 0 : i32
    %33 = arith.cmpi eq, %arg2, %c0_i32_27 : i32
    %34 = arith.extui %33 : i1 to i32
    %c0_i32_28 = arith.constant 0 : i32
    %35 = arith.cmpi ne, %34, %c0_i32_28 : i32
    scf.if %35 {
      %c0_29 = arith.constant 0 : index
      %c0_30 = arith.constant 0 : index
      %36 = vector.load %arg10[%c0_29, %c0_30] : memref<8x128xf32, #tpu.memory_space<vmem>>, vector<8x128xf32>
      %cst = arith.constant dense<0.000000e+00> : vector<8xf32>
      %37 = vector.multi_reduction <add>, %36, %cst [1] : vector<8x128xf32> to vector<8xf32>
      %38 = vector.shape_cast %37 : vector<8xf32> to vector<8x1xf32>
      %c0_31 = arith.constant 0 : index
      %c0_32 = arith.constant 0 : index
      %c0_33 = arith.constant 0 : index
      %39 = vector.load %arg5[%c0_31, %c0_32, %c0_33] : memref<1x8x1xf32, #tpu.memory_space<vmem>>, vector<1x8x1xf32>
      %40 = vector.shape_cast %39 : vector<1x8x1xf32> to vector<8x1xf32>
      %41 = vector.shape_cast %38 : vector<8x1xf32> to vector<1x8x1xf32>
      tpu.vector_store %arg5[%c0_31, %c0_32, %c0_33], %41 {strides = array<i32>} : memref<1x8x1xf32, #tpu.memory_space<vmem>>, vector<1x8x1xf32>,
      %c0_34 = arith.constant 0 : index
      %c0_35 = arith.constant 0 : index
      %42 = vector.load %arg11[%c0_34, %c0_35] : memref<8x128xf32, #tpu.memory_space<vmem>>, vector<8x128xf32>
      %cst_36 = arith.constant dense<0.000000e+00> : vector<8xf32>
      %43 = vector.multi_reduction <add>, %42, %cst_36 [1] : vector<8x128xf32> to vector<8xf32>
      %44 = vector.shape_cast %43 : vector<8xf32> to vector<8x1xf32>
      %c0_37 = arith.constant 0 : index
      %c0_38 = arith.constant 0 : index
      %c0_39 = arith.constant 0 : index
      %45 = vector.load %arg6[%c0_37, %c0_38, %c0_39] : memref<1x8x1xf32, #tpu.memory_space<vmem>>, vector<1x8x1xf32>
      %46 = vector.shape_cast %45 : vector<1x8x1xf32> to vector<8x1xf32>
      %47 = vector.shape_cast %44 : vector<8x1xf32> to vector<1x8x1xf32>
      tpu.vector_store %arg6[%c0_37, %c0_38, %c0_39], %47 {strides = array<i32>} : memref<1x8x1xf32, #tpu.memory_space<vmem>>, vector<1x8x1xf32>,
      %c0_40 = arith.constant 0 : index
      %c0_41 = arith.constant 0 : index
      %48 = vector.load %arg12[%c0_40, %c0_41] : memref<8x128xf32, #tpu.memory_space<vmem>>, vector<8x128xf32>
      %cst_42 = arith.constant dense<0.000000e+00> : vector<8xf32>
      %49 = vector.multi_reduction <add>, %48, %cst_42 [1] : vector<8x128xf32> to vector<8xf32>
      %50 = vector.shape_cast %49 : vector<8xf32> to vector<8x1xf32>
      %c0_43 = arith.constant 0 : index
      %c0_44 = arith.constant 0 : index
      %c0_45 = arith.constant 0 : index
      %51 = vector.load %arg7[%c0_43, %c0_44, %c0_45] : memref<1x8x1xf32, #tpu.memory_space<vmem>>, vector<1x8x1xf32>
      %52 = vector.shape_cast %51 : vector<1x8x1xf32> to vector<8x1xf32>
      %53 = vector.shape_cast %50 : vector<8x1xf32> to vector<1x8x1xf32>
      tpu.vector_store %arg7[%c0_43, %c0_44, %c0_45], %53 {strides = array<i32>} : memref<1x8x1xf32, #tpu.memory_space<vmem>>, vector<1x8x1xf32>,
      %c0_46 = arith.constant 0 : index
      %c0_47 = arith.constant 0 : index
      %54 = vector.load %arg13[%c0_46, %c0_47] : memref<8x128xf32, #tpu.memory_space<vmem>>, vector<8x128xf32>
      %cst_48 = arith.constant dense<0.000000e+00> : vector<8xf32>
      %55 = vector.multi_reduction <add>, %54, %cst_48 [1] : vector<8x128xf32> to vector<8xf32>
      %56 = vector.shape_cast %55 : vector<8xf32> to vector<8x1xf32>
      %c0_49 = arith.constant 0 : index
      %c0_50 = arith.constant 0 : index
      %c0_51 = arith.constant 0 : index
      %57 = vector.load %arg8[%c0_49, %c0_50, %c0_51] : memref<1x8x1xf32, #tpu.memory_space<vmem>>, vector<1x8x1xf32>
      %58 = vector.shape_cast %57 : vector<1x8x1xf32> to vector<8x1xf32>
      %59 = vector.shape_cast %56 : vector<8x1xf32> to vector<1x8x1xf32>
      tpu.vector_store %arg8[%c0_49, %c0_50, %c0_51], %59 {strides = array<i32>} : memref<1x8x1xf32, #tpu.memory_space<vmem>>, vector<1x8x1xf32>,
      %c0_52 = arith.constant 0 : index
      %c0_53 = arith.constant 0 : index
      %60 = vector.load %arg14[%c0_52, %c0_53] : memref<8x128xf32, #tpu.memory_space<vmem>>, vector<8x128xf32>
      %cst_54 = arith.constant dense<0.000000e+00> : vector<8xf32>
      %61 = vector.multi_reduction <add>, %60, %cst_54 [1] : vector<8x128xf32> to vector<8xf32>
      %62 = vector.shape_cast %61 : vector<8xf32> to vector<8x1xf32>
      %c0_55 = arith.constant 0 : index
      %c0_56 = arith.constant 0 : index
      %c0_57 = arith.constant 0 : index
      %63 = vector.load %arg9[%c0_55, %c0_56, %c0_57] : memref<1x8x1xf32, #tpu.memory_space<vmem>>, vector<1x8x1xf32>
      %64 = vector.shape_cast %63 : vector<1x8x1xf32> to vector<8x1xf32>
      %65 = vector.shape_cast %62 : vector<8x1xf32> to vector<1x8x1xf32>
      tpu.vector_store %arg9[%c0_55, %c0_56, %c0_57], %65 {strides = array<i32>} : memref<1x8x1xf32, #tpu.memory_space<vmem>>, vector<1x8x1xf32>,
    } else {
    }
    return
  }
  func.func @transform_0(%arg0: i32, %arg1: i32, %arg2: i32) -> (i32, i32) {
    %c1_i32 = arith.constant 1 : i32
    %0 = arith.muli %arg1, %c1_i32 : i32
    %1 = arith.addi %0, %arg2 : i32
    %c0_i32 = arith.constant 0 : i32
    %2 = arith.minsi %1, %c0_i32 : i32
    %c0_i32_0 = arith.constant 0 : i32
    return %arg0, %2 : i32, i32
  }
  func.func @transform_1(%arg0: i32, %arg1: i32, %arg2: i32) -> (i32, i32) {
    %c1_i32 = arith.constant 1 : i32
    %0 = arith.muli %arg1, %c1_i32 : i32
    %1 = arith.addi %0, %arg2 : i32
    %c0_i32 = arith.constant 0 : i32
    %2 = arith.minsi %1, %c0_i32 : i32
    %c0_i32_0 = arith.constant 0 : i32
    return %arg0, %2 : i32, i32
  }
  func.func @transform_2(%arg0: i32, %arg1: i32, %arg2: i32) -> (i32, i32, i32) {
    %c0_i32 = arith.constant 0 : i32
    %c0_i32_0 = arith.constant 0 : i32
    return %arg1, %arg0, %c0_i32 : i32, i32, i32
  }
  func.func @transform_3(%arg0: i32, %arg1: i32, %arg2: i32) -> (i32, i32, i32) {
    %c0_i32 = arith.constant 0 : i32
    %c0_i32_0 = arith.constant 0 : i32
    return %arg1, %arg0, %c0_i32 : i32, i32, i32
  }
  func.func @transform_4(%arg0: i32, %arg1: i32, %arg2: i32) -> (i32, i32, i32) {
    %c0_i32 = arith.constant 0 : i32
    %c0_i32_0 = arith.constant 0 : i32
    return %arg1, %arg0, %c0_i32 : i32, i32, i32
  }
  func.func @transform_5(%arg0: i32, %arg1: i32, %arg2: i32) -> (i32, i32, i32) {
    %c0_i32 = arith.constant 0 : i32
    %c0_i32_0 = arith.constant 0 : i32
    return %arg1, %arg0, %c0_i32 : i32, i32, i32
  }
  func.func @transform_6(%arg0: i32, %arg1: i32, %arg2: i32) -> (i32, i32, i32) {
    %c0_i32 = arith.constant 0 : i32
    %c0_i32_0 = arith.constant 0 : i32
    return %arg1, %arg0, %c0_i32 : i32, i32, i32
  }
}

</mosaic_0001>

<llo_original>
// kernel: tpu_custom_call.1
$region0: #{tpu_custom_call.1}
  #allocation0 [shape = 'u32[]', space=smem, size = 0x4, offset = 0x4, fixed_abs, tag = 'smem constant byte address 0x4 - core index']
  #allocation1 [shape = 'u32[144,128]{1,0:T(1,128)}', space=vmem, size = 0x12000, scoped, tag = 'internal scratch']
  #allocation2 [shape = 'f32[8,128]{1,0:T(8,128)}', space=vmem, size = 0x1000, scoped, tag = 'scratch operand']
  #allocation3 [shape = 'f32[8,128]{1,0:T(8,128)}', space=vmem, size = 0x1000, scoped, tag = 'scratch operand']
  #allocation4 [shape = 'f32[8,128]{1,0:T(8,128)}', space=vmem, size = 0x1000, scoped, tag = 'scratch operand']
  #allocation5 [shape = 'f32[8,128]{1,0:T(8,128)}', space=vmem, size = 0x1000, scoped, tag = 'scratch operand']
  #allocation6 [shape = 'f32[8,128]{1,0:T(8,128)}', space=vmem, size = 0x1000, scoped, tag = 'scratch operand']
  %s0 = inlined_call_operand.hbm [shape: f32[4,256], index: 0, kind: input, shape index: {}]
  %s1 = inlined_call_operand.hbm [shape: f32[4,256], index: 1, kind: input, shape index: {}]
  %s2 = inlined_call_operand.vmem [shape: f32[1,4,1], index: 2, kind: output, shape index: {0}]
  %s3 = inlined_call_operand.vmem [shape: f32[1,4,1], index: 3, kind: output, shape index: {1}]
  %s4 = inlined_call_operand.vmem [shape: f32[1,4,1], index: 4, kind: output, shape index: {2}]
  %s5 = inlined_call_operand.vmem [shape: f32[1,4,1], index: 5, kind: output, shape index: {3}]
  %s6 = inlined_call_operand.vmem [shape: f32[1,4,1], index: 6, kind: output, shape index: {4}]
  %7 = xla_tuple %s2, %s3, %s4, %s5, %s6
  %s8 = sld [smem:[#allocation0]]
  $region216: #{tpu_custom_call.1} parent=0
    _
  %s10 = ssub.s32 1, %s8
  %s11 = scalar_select 0, %s10, %s8
  $region1: #{tpu_custom_call.1} parent=0
    #allocation7 [shape = 'u8[8192]{0}', space=vmem, size = 0x2000, scoped, tag = 'input window, operand 0, single buffered']
    #allocation8 [shape = 's32[1]{0}', space=sflag, size = 0x4, scoped, tag = 'scoped memory for tpu_custom_call.1']
    #allocation9 [shape = 'u8[8192]{0}', space=vmem, size = 0x2000, scoped, tag = 'input window, operand 1, single buffered']
    #allocation10 [shape = 's32[1]{0}', space=sflag, size = 0x4, scoped, tag = 'scoped memory for tpu_custom_call.1']
    #allocation11 [shape = 'u8[4096]{0}', space=vmem, size = 0x1000, scoped, tag = 'output window, operand 0, single buffered']
    #allocation12 [shape = 'u8[4096]{0}', space=vmem, size = 0x1000, scoped, tag = 'output window, operand 1, single buffered']
    #allocation13 [shape = 'u8[4096]{0}', space=vmem, size = 0x1000, scoped, tag = 'output window, operand 2, single buffered']
    #allocation14 [shape = 'u8[4096]{0}', space=vmem, size = 0x1000, scoped, tag = 'output window, operand 3, single buffered']
    #allocation15 [shape = 'u8[4096]{0}', space=vmem, size = 0x1000, scoped, tag = 'output window, operand 4, single buffered']
    %12 = vsyncpa [#allocation8], 0
    %13 = vsyncpa [#allocation10], 0
    // Predicated region
    $region2: #{tpu_custom_call.1} parent=1 // pred_check
      _
    $region3: #{tpu_custom_call.1} parent=1 // pred_check_branch
      %15 = sbr.rel (0) target = $region5
    $region4: #{tpu_custom_call.1} parent=1 // pred_region
      %s16 = sadd.s32 0, 0
      %p17 = scmp.lt.s32.totalorder %s16, 0
      %s18 = scalar_select %p17, %s16, 0
      %s19 = smul.u32 2, %s18
      %s21 = ssub.s32 256, 128
      %22 = vsyncadd [#allocation8], %s21
      %s23 = smul.addr %s19, 64
      %s24 = scalar_lea.hbm %s0, %s23
      %s25 = sshll.u32 [#allocation7], 4
      %s26 = int_to_ptr.vmem [resolvable:$true] %s25
      %31 = dma.hbm_to_vmem [thread:$0]  %s24, 128, %s26, [#allocation8], 128, 128, 8
    $region5: #{tpu_custom_call.1} parent=1 // pred_fallthru
      _
    // Predicated region
    $region6: #{tpu_custom_call.1} parent=1 // pred_check
      _
    $region7: #{tpu_custom_call.1} parent=1 // pred_check_branch
      %33 = sbr.rel (0) target = $region9
    $region8: #{tpu_custom_call.1} parent=1 // pred_region
      %s34 = sadd.s32 0, 0
      %p35 = scmp.lt.s32.totalorder %s34, 0
      %s36 = scalar_select %p35, %s34, 0
      %s37 = smul.u32 2, %s36
      %s39 = ssub.s32 256, 128
      %40 = vsyncadd [#allocation10], %s39
      %s41 = smul.addr %s37, 64
      %s42 = scalar_lea.hbm %s1, %s41
      %s43 = sshll.u32 [#allocation9], 4
      %s44 = int_to_ptr.vmem [resolvable:$true] %s43
      %49 = dma.hbm_to_vmem [thread:$0]  %s42, 128, %s44, [#allocation10], 128, 128, 8
    $region9: #{tpu_custom_call.1} parent=1 // pred_fallthru
      _
    // Predicated region
    $region10: #{tpu_custom_call.1} parent=1 // pred_check
      _
    $region11: #{tpu_custom_call.1} parent=1 // pred_check_branch
      %51 = sbr.rel (0) target = $region13
    $region12: #{tpu_custom_call.1} parent=1 // pred_region
      %52 = dma.done [#allocation8], 256
    $region13: #{tpu_custom_call.1} parent=1 // pred_fallthru
      _
    // Predicated region
    $region14: #{tpu_custom_call.1} parent=1 // pred_check
      _
    $region15: #{tpu_custom_call.1} parent=1 // pred_check_branch
      %54 = sbr.rel (0) target = $region17
    $region16: #{tpu_custom_call.1} parent=1 // pred_region
      %55 = dma.done [#allocation10], 256
    $region17: #{tpu_custom_call.1} parent=1 // pred_fallthru
      _
    %s56 = sadd.s32 0, 0
    %p57 = scmp.lt.s32.totalorder %s56, 0
    %s58 = scalar_select %p57, %s56, 0
    %s59 = smul.u32 2, %s58
    %s60 = sadd.s32 0, 0
    %p61 = scmp.lt.s32.totalorder %s60, 0
    %s62 = scalar_select %p61, %s60, 0
    %s63 = smul.u32 2, %s62
    %p64 = scmp.eq.s32.totalorder 0, 0
    // Predicated region
    $region18: #{tpu_custom_call.1} parent=1 // pred_check
      %p65 = pneg %p64
    $region19: #{tpu_custom_call.1} parent=1 // pred_check_branch
      %67 = sbr.rel (%p65) target = $region21
    $region20: #{tpu_custom_call.1} parent=1 // pred_region
      %68 = vst [vmem:[#allocation2] sm:$0xff] 0.0
      %69 = vst [vmem:[#allocation3] sm:$0xff] 0.0
      %70 = vst [vmem:[#allocation4] sm:$0xff] 0.0
      %71 = vst [vmem:[#allocation5] sm:$0xff] 0.0
      %72 = vst [vmem:[#allocation6] sm:$0xff] 0.0
    $region21: #{tpu_custom_call.1} parent=1 // pred_fallthru
      _
    %v73 = vld [vmem:[#allocation2] sm:$0xff]
    %v74 = vld [vmem:[#allocation3] sm:$0xff]
    %v75 = vld [vmem:[#allocation4] sm:$0xff]
    %v76 = vld [vmem:[#allocation5] sm:$0xff]
    %v77 = vld [vmem:[#allocation6] sm:$0xff]
    %v78 = vld [vmem:[#allocation7] sm:$0xf]
    %v79 = vld [vmem:[#allocation7 + $0x8] sm:$0xf]
    %v80 = vld [vmem:[#allocation9] sm:$0xf]
    %v81 = vld [vmem:[#allocation9 + $0x8] sm:$0xf]
    %v84 = vcombine.low %v78, %v79
    %v86 = vadd.f32 %v73, %v84
    %v89 = vcombine.low %v80, %v81
    %v91 = vadd.f32 %v74, %v89
    %v92 = vmul.f32 %v78, %v78
    %v93 = vmul.f32 %v79, %v79
    %v96 = vcombine.low %v92, %v93
    %v98 = vadd.f32 %v75, %v96
    %v99 = vmul.f32 %v80, %v80
    %v100 = vmul.f32 %v81, %v81
    %v103 = vcombine.low %v99, %v100
    %v105 = vadd.f32 %v76, %v103
    %v106 = vmul.f32 %v78, %v80
    %v107 = vmul.f32 %v79, %v81
    %v110 = vcombine.low %v106, %v107
    %v112 = vadd.f32 %v77, %v110
    %v113 = vld [vmem:[#allocation7 + $0x4] sm:$0xf]
    %v114 = vld [vmem:[#allocation7 + $0xc] sm:$0xf]
    %v115 = vld [vmem:[#allocation9 + $0x4] sm:$0xf]
    %v116 = vld [vmem:[#allocation9 + $0xc] sm:$0xf]
    %v119 = vcombine.low %v113, %v114
    %v121 = vadd.f32 %v86, %v119
    %v124 = vcombine.low %v115, %v116
    %v126 = vadd.f32 %v91, %v124
    %v127 = vmul.f32 %v113, %v113
    %v128 = vmul.f32 %v114, %v114
    %v131 = vcombine.low %v127, %v128
    %v133 = vadd.f32 %v98, %v131
    %v134 = vmul.f32 %v115, %v115
    %v135 = vmul.f32 %v116, %v116
    %v138 = vcombine.low %v134, %v135
    %v140 = vadd.f32 %v105, %v138
    %v141 = vmul.f32 %v113, %v115
    %v142 = vmul.f32 %v114, %v116
    %v145 = vcombine.low %v141, %v142
    %v147 = vadd.f32 %v112, %v145
    %148 = vst [vmem:[#allocation2] sm:$0xff] %v121
    %149 = vst [vmem:[#allocation3] sm:$0xff] %v126
    %150 = vst [vmem:[#allocation4] sm:$0xff] %v133
    %151 = vst [vmem:[#allocation5] sm:$0xff] %v140
    %152 = vst [vmem:[#allocation6] sm:$0xff] %v147
    // Predicated region
    $region22: #{tpu_custom_call.1} parent=1 // pred_check
      %p153 = pneg %p64
    $region23: #{tpu_custom_call.1} parent=1 // pred_check_branch
      %155 = sbr.rel (%p153) target = $region25
    $region24: #{tpu_custom_call.1} parent=1 // pred_region
      %v156 = vld [vmem:[#allocation2] sm:$0xff]
      %157 = vadd.xlane.f32.xlu0 %v156
      %v158 = vpop.xlane.xlu0 %157
      %vm159 = vcmask 7168
      %160 = vst.msk [vmem:[#allocation11] sm:$0xff] %vm159, %v158
      %v161 = vld [vmem:[#allocation3] sm:$0xff]
      %162 = vadd.xlane.f32.xlu0 %v161
      %v163 = vpop.xlane.xlu0 %162
      %164 = vst.msk [vmem:[#allocation12] sm:$0xff] %vm159, %v163
      %v165 = vld [vmem:[#allocation4] sm:$0xff]
      %166 = vadd.xlane.f32.xlu0 %v165
      %v167 = vpop.xlane.xlu0 %166
      %168 = vst.msk [vmem:[#allocation13] sm:$0xff] %vm159, %v167
      %v169 = vld [vmem:[#allocation5] sm:$0xff]
      %170 = vadd.xlane.f32.xlu0 %v169
      %v171 = vpop.xlane.xlu0 %170
      %172 = vst.msk [vmem:[#allocation14] sm:$0xff] %vm159, %v171
      %v173 = vld [vmem:[#allocation6] sm:$0xff]
      %174 = vadd.xlane.f32.xlu0 %v173
      %v175 = vpop.xlane.xlu0 %174
      %176 = vst.msk [vmem:[#allocation15] sm:$0xff] %vm159, %v175
    $region25: #{tpu_custom_call.1} parent=1 // pred_fallthru
      _
    // Predicated region
    $region26: #{tpu_custom_call.1} parent=1 // pred_check
      _
    $region27: #{tpu_custom_call.1} parent=1 // pred_check_branch
      %178 = sbr.rel (0) target = $region29
    $region28: #{tpu_custom_call.1} parent=1 // pred_region
      // Predicated region
      $region30: #{tpu_custom_call.1} parent=28 // pred_check
        _
      $region31: #{tpu_custom_call.1} parent=28 // pred_check_branch
        %180 = sbr.rel (0) target = $region33
      $region32: #{tpu_custom_call.1} parent=28 // pred_region
        // Predicated region
        $region34: #{tpu_custom_call.1} parent=32 // pred_check
          _
        $region35: #{tpu_custom_call.1} parent=32 // pred_check_branch
          %182 = sbr.rel target = $region37
        $region36: #{tpu_custom_call.1} parent=32 // pred_region
          // Predicated region
          $region49: #{tpu_custom_call.1} parent=36 // pred_check
            _
          $region50: #{tpu_custom_call.1} parent=36 // pred_check_branch
            %198 = sbr.rel (0) target = $region52
          $region51: #{tpu_custom_call.1} parent=36 // pred_region
            %s200 = ssub.s32 16, 1
            loop: start=0, step=1, limit=1
            $region53: #{tpu_custom_call.1} parent=51 // loop_pre_header
              _
            $region54: #{tpu_custom_call.1} parent=51 // loop_header
              %s202 = sphi 0, %s206
              %p203 = scmp.ge.s32.totalorder %s202, 1
              %s207 = sphi [#allocation11], [#allocation11]
              %s208 = sphi %s2, %s2
            $region55: #{tpu_custom_call.1} parent=51 // loop_header_branch
              %205 = sbr.rel (%p203) target = $region59
            $region56: #{tpu_custom_call.1} parent=51 // loop_body
              %v209 = vld [vmem:[%s207] sm:%s200]
              %210 = vst [vmem:[%s208] sm:%s200] %v209
            $region57: #{tpu_custom_call.1} parent=51 // loop_footer
              %s206 = sadd.s32 1, %s202
            $region58: #{tpu_custom_call.1} parent=51 // loop_footer_branch
              %201 = sbr.rel target = $region54
            $region59: #{tpu_custom_call.1} parent=51 // loop_exit
              _
          $region52: #{tpu_custom_call.1} parent=36 // pred_fallthru
            _
        $region37: #{tpu_custom_call.1} parent=32 // pred_fallthru
          _
        // Predicated region
        $region38: #{tpu_custom_call.1} parent=32 // pred_check
          _
        $region39: #{tpu_custom_call.1} parent=32 // pred_check_branch
          %184 = sbr.rel (0) target = $region41
        $region40: #{tpu_custom_call.1} parent=32 // pred_region
          %s186 = ssub.s32 16, 1
          loop: start=0, step=1, limit=1
          $region42: #{tpu_custom_call.1} parent=40 // loop_pre_header
            _
          $region43: #{tpu_custom_call.1} parent=40 // loop_header
            %s188 = sphi 0, %s192
            %p189 = scmp.ge.s32.totalorder %s188, 1
            %s193 = sphi [#allocation11], [#allocation11]
            %s194 = sphi %s2, %s2
          $region44: #{tpu_custom_call.1} parent=40 // loop_header_branch
            %191 = sbr.rel (%p189) target = $region48
          $region45: #{tpu_custom_call.1} parent=40 // loop_body
            %v195 = vld [vmem:[%s193] sm:%s186]
            %196 = vst [vmem:[%s194] sm:%s186] %v195
          $region46: #{tpu_custom_call.1} parent=40 // loop_footer
            %s192 = sadd.s32 1, %s188
          $region47: #{tpu_custom_call.1} parent=40 // loop_footer_branch
            %187 = sbr.rel target = $region43
          $region48: #{tpu_custom_call.1} parent=40 // loop_exit
            _
        $region41: #{tpu_custom_call.1} parent=32 // pred_fallthru
          _
      $region33: #{tpu_custom_call.1} parent=28 // pred_fallthru
        _
      %211 = vnop
    $region29: #{tpu_custom_call.1} parent=1 // pred_fallthru
      _
    // Predicated region
    $region60: #{tpu_custom_call.1} parent=1 // pred_check
      _
    $region61: #{tpu_custom_call.1} parent=1 // pred_check_branch
      %213 = sbr.rel (0) target = $region63
    $region62: #{tpu_custom_call.1} parent=1 // pred_region
      // Predicated region
      $region64: #{tpu_custom_call.1} parent=62 // pred_check
        _
      $region65: #{tpu_custom_call.1} parent=62 // pred_check_branch
        %215 = sbr.rel (0) target = $region67
      $region66: #{tpu_custom_call.1} parent=62 // pred_region
        // Predicated region
        $region68: #{tpu_custom_call.1} parent=66 // pred_check
          _
        $region69: #{tpu_custom_call.1} parent=66 // pred_check_branch
          %217 = sbr.rel target = $region71
        $region70: #{tpu_custom_call.1} parent=66 // pred_region
          // Predicated region
          $region83: #{tpu_custom_call.1} parent=70 // pred_check
            _
          $region84: #{tpu_custom_call.1} parent=70 // pred_check_branch
            %233 = sbr.rel (0) target = $region86
          $region85: #{tpu_custom_call.1} parent=70 // pred_region
            %s235 = ssub.s32 16, 1
            loop: start=0, step=1, limit=1
            $region87: #{tpu_custom_call.1} parent=85 // loop_pre_header
              _
            $region88: #{tpu_custom_call.1} parent=85 // loop_header
              %s237 = sphi 0, %s241
              %p238 = scmp.ge.s32.totalorder %s237, 1
              %s242 = sphi [#allocation12], [#allocation12]
              %s243 = sphi %s3, %s3
            $region89: #{tpu_custom_call.1} parent=85 // loop_header_branch
              %240 = sbr.rel (%p238) target = $region93
            $region90: #{tpu_custom_call.1} parent=85 // loop_body
              %v244 = vld [vmem:[%s242] sm:%s235]
              %245 = vst [vmem:[%s243] sm:%s235] %v244
            $region91: #{tpu_custom_call.1} parent=85 // loop_footer
              %s241 = sadd.s32 1, %s237
            $region92: #{tpu_custom_call.1} parent=85 // loop_footer_branch
              %236 = sbr.rel target = $region88
            $region93: #{tpu_custom_call.1} parent=85 // loop_exit
              _
          $region86: #{tpu_custom_call.1} parent=70 // pred_fallthru
            _
        $region71: #{tpu_custom_call.1} parent=66 // pred_fallthru
          _
        // Predicated region
        $region72: #{tpu_custom_call.1} parent=66 // pred_check
          _
        $region73: #{tpu_custom_call.1} parent=66 // pred_check_branch
          %219 = sbr.rel (0) target = $region75
        $region74: #{tpu_custom_call.1} parent=66 // pred_region
          %s221 = ssub.s32 16, 1
          loop: start=0, step=1, limit=1
          $region76: #{tpu_custom_call.1} parent=74 // loop_pre_header
            _
          $region77: #{tpu_custom_call.1} parent=74 // loop_header
            %s223 = sphi 0, %s227
            %p224 = scmp.ge.s32.totalorder %s223, 1
            %s228 = sphi [#allocation12], [#allocation12]
            %s229 = sphi %s3, %s3
          $region78: #{tpu_custom_call.1} parent=74 // loop_header_branch
            %226 = sbr.rel (%p224) target = $region82
          $region79: #{tpu_custom_call.1} parent=74 // loop_body
            %v230 = vld [vmem:[%s228] sm:%s221]
            %231 = vst [vmem:[%s229] sm:%s221] %v230
          $region80: #{tpu_custom_call.1} parent=74 // loop_footer
            %s227 = sadd.s32 1, %s223
          $region81: #{tpu_custom_call.1} parent=74 // loop_footer_branch
            %222 = sbr.rel target = $region77
          $region82: #{tpu_custom_call.1} parent=74 // loop_exit
            _
        $region75: #{tpu_custom_call.1} parent=66 // pred_fallthru
          _
      $region67: #{tpu_custom_call.1} parent=62 // pred_fallthru
        _
      %246 = vnop
    $region63: #{tpu_custom_call.1} parent=1 // pred_fallthru
      _
    // Predicated region
    $region94: #{tpu_custom_call.1} parent=1 // pred_check
      _
    $region95: #{tpu_custom_call.1} parent=1 // pred_check_branch
      %248 = sbr.rel (0) target = $region97
    $region96: #{tpu_custom_call.1} parent=1 // pred_region
      // Predicated region
      $region98: #{tpu_custom_call.1} parent=96 // pred_check
        _
      $region99: #{tpu_custom_call.1} parent=96 // pred_check_branch
        %250 = sbr.rel (0) target = $region101
      $region100: #{tpu_custom_call.1} parent=96 // pred_region
        // Predicated region
        $region102: #{tpu_custom_call.1} parent=100 // pred_check
          _
        $region103: #{tpu_custom_call.1} parent=100 // pred_check_branch
          %252 = sbr.rel target = $region105
        $region104: #{tpu_custom_call.1} parent=100 // pred_region
          // Predicated region
          $region117: #{tpu_custom_call.1} parent=104 // pred_check
            _
          $region118: #{tpu_custom_call.1} parent=104 // pred_check_branch
            %268 = sbr.rel (0) target = $region120
          $region119: #{tpu_custom_call.1} parent=104 // pred_region
            %s270 = ssub.s32 16, 1
            loop: start=0, step=1, limit=1
            $region121: #{tpu_custom_call.1} parent=119 // loop_pre_header
              _
            $region122: #{tpu_custom_call.1} parent=119 // loop_header
              %s272 = sphi 0, %s276
              %p273 = scmp.ge.s32.totalorder %s272, 1
              %s277 = sphi [#allocation13], [#allocation13]
              %s278 = sphi %s4, %s4
            $region123: #{tpu_custom_call.1} parent=119 // loop_header_branch
              %275 = sbr.rel (%p273) target = $region127
            $region124: #{tpu_custom_call.1} parent=119 // loop_body
              %v279 = vld [vmem:[%s277] sm:%s270]
              %280 = vst [vmem:[%s278] sm:%s270] %v279
            $region125: #{tpu_custom_call.1} parent=119 // loop_footer
              %s276 = sadd.s32 1, %s272
            $region126: #{tpu_custom_call.1} parent=119 // loop_footer_branch
              %271 = sbr.rel target = $region122
            $region127: #{tpu_custom_call.1} parent=119 // loop_exit
              _
          $region120: #{tpu_custom_call.1} parent=104 // pred_fallthru
            _
        $region105: #{tpu_custom_call.1} parent=100 // pred_fallthru
          _
        // Predicated region
        $region106: #{tpu_custom_call.1} parent=100 // pred_check
          _
        $region107: #{tpu_custom_call.1} parent=100 // pred_check_branch
          %254 = sbr.rel (0) target = $region109
        $region108: #{tpu_custom_call.1} parent=100 // pred_region
          %s256 = ssub.s32 16, 1
          loop: start=0, step=1, limit=1
          $region110: #{tpu_custom_call.1} parent=108 // loop_pre_header
            _
          $region111: #{tpu_custom_call.1} parent=108 // loop_header
            %s258 = sphi 0, %s262
            %p259 = scmp.ge.s32.totalorder %s258, 1
            %s263 = sphi [#allocation13], [#allocation13]
            %s264 = sphi %s4, %s4
          $region112: #{tpu_custom_call.1} parent=108 // loop_header_branch
            %261 = sbr.rel (%p259) target = $region116
          $region113: #{tpu_custom_call.1} parent=108 // loop_body
            %v265 = vld [vmem:[%s263] sm:%s256]
            %266 = vst [vmem:[%s264] sm:%s256] %v265
          $region114: #{tpu_custom_call.1} parent=108 // loop_footer
            %s262 = sadd.s32 1, %s258
          $region115: #{tpu_custom_call.1} parent=108 // loop_footer_branch
            %257 = sbr.rel target = $region111
          $region116: #{tpu_custom_call.1} parent=108 // loop_exit
            _
        $region109: #{tpu_custom_call.1} parent=100 // pred_fallthru
          _
      $region101: #{tpu_custom_call.1} parent=96 // pred_fallthru
        _
      %281 = vnop
    $region97: #{tpu_custom_call.1} parent=1 // pred_fallthru
      _
    // Predicated region
    $region128: #{tpu_custom_call.1} parent=1 // pred_check
      _
    $region129: #{tpu_custom_call.1} parent=1 // pred_check_branch
      %283 = sbr.rel (0) target = $region131
    $region130: #{tpu_custom_call.1} parent=1 // pred_region
      // Predicated region
      $region132: #{tpu_custom_call.1} parent=130 // pred_check
        _
      $region133: #{tpu_custom_call.1} parent=130 // pred_check_branch
        %285 = sbr.rel (0) target = $region135
      $region134: #{tpu_custom_call.1} parent=130 // pred_region
        // Predicated region
        $region136: #{tpu_custom_call.1} parent=134 // pred_check
          _
        $region137: #{tpu_custom_call.1} parent=134 // pred_check_branch
          %287 = sbr.rel target = $region139
        $region138: #{tpu_custom_call.1} parent=134 // pred_region
          // Predicated region
          $region151: #{tpu_custom_call.1} parent=138 // pred_check
            _
          $region152: #{tpu_custom_call.1} parent=138 // pred_check_branch
            %303 = sbr.rel (0) target = $region154
          $region153: #{tpu_custom_call.1} parent=138 // pred_region
            %s305 = ssub.s32 16, 1
            loop: start=0, step=1, limit=1
            $region155: #{tpu_custom_call.1} parent=153 // loop_pre_header
              _
            $region156: #{tpu_custom_call.1} parent=153 // loop_header
              %s307 = sphi 0, %s311
              %p308 = scmp.ge.s32.totalorder %s307, 1
              %s312 = sphi [#allocation14], [#allocation14]
              %s313 = sphi %s5, %s5
            $region157: #{tpu_custom_call.1} parent=153 // loop_header_branch
              %310 = sbr.rel (%p308) target = $region161
            $region158: #{tpu_custom_call.1} parent=153 // loop_body
              %v314 = vld [vmem:[%s312] sm:%s305]
              %315 = vst [vmem:[%s313] sm:%s305] %v314
            $region159: #{tpu_custom_call.1} parent=153 // loop_footer
              %s311 = sadd.s32 1, %s307
            $region160: #{tpu_custom_call.1} parent=153 // loop_footer_branch
              %306 = sbr.rel target = $region156
            $region161: #{tpu_custom_call.1} parent=153 // loop_exit
              _
          $region154: #{tpu_custom_call.1} parent=138 // pred_fallthru
            _
        $region139: #{tpu_custom_call.1} parent=134 // pred_fallthru
          _
        // Predicated region
        $region140: #{tpu_custom_call.1} parent=134 // pred_check
          _
        $region141: #{tpu_custom_call.1} parent=134 // pred_check_branch
          %289 = sbr.rel (0) target = $region143
        $region142: #{tpu_custom_call.1} parent=134 // pred_region
          %s291 = ssub.s32 16, 1
          loop: start=0, step=1, limit=1
          $region144: #{tpu_custom_call.1} parent=142 // loop_pre_header
            _
          $region145: #{tpu_custom_call.1} parent=142 // loop_header
            %s293 = sphi 0, %s297
            %p294 = scmp.ge.s32.totalorder %s293, 1
            %s298 = sphi [#allocation14], [#allocation14]
            %s299 = sphi %s5, %s5
          $region146: #{tpu_custom_call.1} parent=142 // loop_header_branch
            %296 = sbr.rel (%p294) target = $region150
          $region147: #{tpu_custom_call.1} parent=142 // loop_body
            %v300 = vld [vmem:[%s298] sm:%s291]
            %301 = vst [vmem:[%s299] sm:%s291] %v300
          $region148: #{tpu_custom_call.1} parent=142 // loop_footer
            %s297 = sadd.s32 1, %s293
          $region149: #{tpu_custom_call.1} parent=142 // loop_footer_branch
            %292 = sbr.rel target = $region145
          $region150: #{tpu_custom_call.1} parent=142 // loop_exit
            _
        $region143: #{tpu_custom_call.1} parent=134 // pred_fallthru
          _
      $region135: #{tpu_custom_call.1} parent=130 // pred_fallthru
        _
      %316 = vnop
    $region131: #{tpu_custom_call.1} parent=1 // pred_fallthru
      _
    // Predicated region
    $region162: #{tpu_custom_call.1} parent=1 // pred_check
      _
    $region163: #{tpu_custom_call.1} parent=1 // pred_check_branch
      %318 = sbr.rel (0) target = $region165
    $region164: #{tpu_custom_call.1} parent=1 // pred_region
      // Predicated region
      $region166: #{tpu_custom_call.1} parent=164 // pred_check
        _
      $region167: #{tpu_custom_call.1} parent=164 // pred_check_branch
        %320 = sbr.rel (0) target = $region169
      $region168: #{tpu_custom_call.1} parent=164 // pred_region
        // Predicated region
        $region170: #{tpu_custom_call.1} parent=168 // pred_check
          _
        $region171: #{tpu_custom_call.1} parent=168 // pred_check_branch
          %322 = sbr.rel target = $region173
        $region172: #{tpu_custom_call.1} parent=168 // pred_region
          // Predicated region
          $region185: #{tpu_custom_call.1} parent=172 // pred_check
            _
          $region186: #{tpu_custom_call.1} parent=172 // pred_check_branch
            %338 = sbr.rel (0) target = $region188
          $region187: #{tpu_custom_call.1} parent=172 // pred_region
            %s340 = ssub.s32 16, 1
            loop: start=0, step=1, limit=1
            $region189: #{tpu_custom_call.1} parent=187 // loop_pre_header
              _
            $region190: #{tpu_custom_call.1} parent=187 // loop_header
              %s342 = sphi 0, %s346
              %p343 = scmp.ge.s32.totalorder %s342, 1
              %s347 = sphi [#allocation15], [#allocation15]
              %s348 = sphi %s6, %s6
            $region191: #{tpu_custom_call.1} parent=187 // loop_header_branch
              %345 = sbr.rel (%p343) target = $region195
            $region192: #{tpu_custom_call.1} parent=187 // loop_body
              %v349 = vld [vmem:[%s347] sm:%s340]
              %350 = vst [vmem:[%s348] sm:%s340] %v349
            $region193: #{tpu_custom_call.1} parent=187 // loop_footer
              %s346 = sadd.s32 1, %s342
            $region194: #{tpu_custom_call.1} parent=187 // loop_footer_branch
              %341 = sbr.rel target = $region190
            $region195: #{tpu_custom_call.1} parent=187 // loop_exit
              _
          $region188: #{tpu_custom_call.1} parent=172 // pred_fallthru
            _
        $region173: #{tpu_custom_call.1} parent=168 // pred_fallthru
          _
        // Predicated region
        $region174: #{tpu_custom_call.1} parent=168 // pred_check
          _
        $region175: #{tpu_custom_call.1} parent=168 // pred_check_branch
          %324 = sbr.rel (0) target = $region177
        $region176: #{tpu_custom_call.1} parent=168 // pred_region
          %s326 = ssub.s32 16, 1
          loop: start=0, step=1, limit=1
          $region178: #{tpu_custom_call.1} parent=176 // loop_pre_header
            _
          $region179: #{tpu_custom_call.1} parent=176 // loop_header
            %s328 = sphi 0, %s332
            %p329 = scmp.ge.s32.totalorder %s328, 1
            %s333 = sphi [#allocation15], [#allocation15]
            %s334 = sphi %s6, %s6
          $region180: #{tpu_custom_call.1} parent=176 // loop_header_branch
            %331 = sbr.rel (%p329) target = $region184
          $region181: #{tpu_custom_call.1} parent=176 // loop_body
            %v335 = vld [vmem:[%s333] sm:%s326]
            %336 = vst [vmem:[%s334] sm:%s326] %v335
          $region182: #{tpu_custom_call.1} parent=176 // loop_footer
            %s332 = sadd.s32 1, %s328
          $region183: #{tpu_custom_call.1} parent=176 // loop_footer_branch
            %327 = sbr.rel target = $region179
          $region184: #{tpu_custom_call.1} parent=176 // loop_exit
            _
        $region177: #{tpu_custom_call.1} parent=168 // pred_fallthru
          _
      $region169: #{tpu_custom_call.1} parent=164 // pred_fallthru
        _
      %351 = vnop
    $region165: #{tpu_custom_call.1} parent=1 // pred_fallthru
      _
    // Predicated region
    $region196: #{tpu_custom_call.1} parent=1 // pred_check
      _
    $region197: #{tpu_custom_call.1} parent=1 // pred_check_branch
      %353 = sbr.rel (0) target = $region199
    $region198: #{tpu_custom_call.1} parent=1 // pred_region
      _
    $region199: #{tpu_custom_call.1} parent=1 // pred_fallthru
      _
    // Predicated region
    $region200: #{tpu_custom_call.1} parent=1 // pred_check
      _
    $region201: #{tpu_custom_call.1} parent=1 // pred_check_branch
      %355 = sbr.rel (0) target = $region203
    $region202: #{tpu_custom_call.1} parent=1 // pred_region
      _
    $region203: #{tpu_custom_call.1} parent=1 // pred_fallthru
      _
    // Predicated region
    $region204: #{tpu_custom_call.1} parent=1 // pred_check
      _
    $region205: #{tpu_custom_call.1} parent=1 // pred_check_branch
      %357 = sbr.rel (0) target = $region207
    $region206: #{tpu_custom_call.1} parent=1 // pred_region
      _
    $region207: #{tpu_custom_call.1} parent=1 // pred_fallthru
      _
    // Predicated region
    $region208: #{tpu_custom_call.1} parent=1 // pred_check
      _
    $region209: #{tpu_custom_call.1} parent=1 // pred_check_branch
      %359 = sbr.rel (0) target = $region211
    $region210: #{tpu_custom_call.1} parent=1 // pred_region
      _
    $region211: #{tpu_custom_call.1} parent=1 // pred_fallthru
      _
    // Predicated region
    $region212: #{tpu_custom_call.1} parent=1 // pred_check
      _
    $region213: #{tpu_custom_call.1} parent=1 // pred_check_branch
      %361 = sbr.rel (0) target = $region215
    $region214: #{tpu_custom_call.1} parent=1 // pred_region
      _
    $region215: #{tpu_custom_call.1} parent=1 // pred_fallthru
      _
    %362 = vsyncpa [#allocation8], 1
    %363 = vsyncpa [#allocation10], 1

</llo_original>
